<compile_context>
chip_gen: v6e
topology: v6e:2x2x1
jax: 0.10.0
libtpu: 0.0.40
codegen_flags: <defaults>
</compile_context>

<pallas_src>
import jax
import jax.numpy as jnp
from jax.experimental import pallas as pl
from jax.experimental.pallas import tpu as pltpu


def _round_up(a, b):
    return (a + b - 1) // b * b


def _tpu_generation():
    try:
        return jax.devices()[0].device_kind.lower()
    except Exception:
        return ""


def _choose_block_rows(N, L, L_out):
    """Rows per grid step.

    Targets ~8 MiB (v7x / default) or ~12 MiB (v5e/v6e) of combined in+out block
    bytes, keeps the row tile a multiple of 8, and forces >= 2 grid steps when
    N >= 16 so the parallel row axis shards across v7x's two TensorCores.
    """
    kind = _tpu_generation()
    target_bytes = 12 * 1024 * 1024 if ("v5" in kind or "v6" in kind) else 8 * 1024 * 1024
    row_bytes = (L + L_out) * 4
    bn = max(8, (target_bytes // max(row_bytes, 1)) // 8 * 8)
    if N >= 16:
        bn = min(bn, _round_up(-(-N // 2), 8))      # at least 2 grid steps
    if bn >= N:
        return int(N)      # single block spanning all rows (full-dim, exempt from the 8 rule)
    return int(bn)


def _conv1d_derivative_kernel(w_ref, x_ref, o_ref):
    """w_ref: SMEM (K,) f32 taps (already scaled by 1/resol, scalar-prefetched).
       x_ref: VMEM (BN, L)     f32 input row tile.
       o_ref: VMEM (BN, L_out) f32 output row tile (exact valid-conv width)."""
    K = w_ref.shape[0]
    L_out = o_ref.shape[-1]
    x = x_ref[...]                                     # load the tile once
    acc = w_ref[0] * x[:, 0:L_out]                     # tap 0: init, no zeros+add
    for k in range(1, K):                              # small static filter -> unrolled
        acc = acc + w_ref[k] * x[:, k:k + L_out]       # static slice -> XLU lane rotate
    o_ref[...] = acc.astype(o_ref.dtype)


def conv1d_derivative(x, der_filter, resol):
    """x: (N, 1, L) float32; der_filter: (1, 1, K); resol: python float.

    Returns (N, 1, L - K + 1) float32 — identical semantics to
    Conv1dDerivative.forward (valid conv, stride 1, no bias, divide by resol).
    """
    x = jnp.asarray(x, jnp.float32)
    N, C, L = x.shape
    assert C == 1, "Conv1dDerivative uses a single input channel"

    # Fold 1/resol into the (tiny) filter taps (fp-reorder vs. PyTorch, within fp32 tol).
    w = jnp.asarray(der_filter, jnp.float32).reshape(-1) / jnp.float32(resol)
    K = int(w.shape[0])
    assert K <= L, "kernel_size must not exceed the input length"
    L_out = L - K + 1

    BN = _choose_block_rows(N, L, L_out)
    grid = (-(-N // BN),)

    x2d = x.reshape(N, L)            # (N,1,L)->(N,L): bitcast, no data movement

    kind = _tpu_generation()
    vmem_limit = (64 if ("v5" in kind or "v6" in kind) else 48) * 1024 * 1024

    # TODO(synk): for extremely long L (a single (BN, L) block exceeding the VMEM
    # budget) add a halo'd width grid axis (input block TW + K - 1 via element-offset
    # index mapping); not needed at the sizes this module is used with.
    out2d = pl.pallas_call(
        _conv1d_derivative_kernel,
        out_shape=jax.ShapeDtypeStruct((N, L_out), jnp.float32),
        grid_spec=pltpu.PrefetchScalarGridSpec(
            num_scalar_prefetch=1,                              # filter taps -> SMEM
            grid=grid,
            in_specs=[pl.BlockSpec((BN, L), lambda i, w_s: (i, 0))],
            out_specs=pl.BlockSpec((BN, L_out), lambda i, w_s: (i, 0)),
        ),
        compiler_params=pltpu.CompilerParams(
            dimension_semantics=("parallel",),                  # shard rows across cores
            vmem_limit_bytes=vmem_limit,
        ),
    )(w, x2d)

    return out2d.reshape(N, 1, L_out)


def _reference(x, der_filter, resol):
    # Plain-JAX reference (valid 1-D conv, cross-correlation like nn.Conv1d).
    w = jnp.asarray(der_filter, jnp.float32).reshape(-1)
    K = w.shape[0]
    N, _, L = x.shape
    L_out = L - K + 1
    out = jnp.zeros((N, L_out), jnp.float32)
    for k in range(K):
        out = out + w[k] * x[:, 0, k:k + L_out]
    return (out / resol).reshape(N, 1, L_out)


if __name__ == "__main__":
    key = jax.random.PRNGKey(0)

    # Parameters matching the module's __init__: central-difference derivative
    # filter, kernel_size=3, resol = dx-style scalar.
    der_filter = [[[-0.5, 0.0, 0.5]]]   # (out_ch=1, in_ch=1, kernel_size=3)
    kernel_size = 3
    dx = 0.1
    resol = dx

    # Small input consistent with forward(): (batch, channels=1, length).
    N, C, L = 4, 1, 32
    x = jax.random.normal(key, (N, C, L), dtype=jnp.float32)

    out = conv1d_derivative(x, der_filter, resol)
    jax.block_until_ready(out)

    ref = _reference(x, der_filter, resol)
    assert out.shape == (N, 1, L - kernel_size + 1)
    assert jnp.allclose(out, ref, atol=1e-5, rtol=1e-5)

    # Larger sanity check: multi-step parallel grid + ragged last row block.
    N2, L2 = 37, 300
    x2 = jax.random.normal(jax.random.PRNGKey(1), (N2, 1, L2), dtype=jnp.float32)
    out2 = conv1d_derivative(x2, der_filter, resol)
    jax.block_until_ready(out2)
    ref2 = _reference(x2, der_filter, resol)
    assert out2.shape == (N2, 1, L2 - kernel_size + 1)
    assert jnp.allclose(out2, ref2, atol=1e-5, rtol=1e-5)

    print("KERNEL_OK")
</pallas_src>

<mosaic_0001>
module attributes {stable_mosaic.version = 11 : i64} {
  func.func @_conv1d_derivative_kernel(%arg0: i32, %arg1: memref<3xf32, #tpu.memory_space<smem>>, %arg2: memref<4x32xf32, #tpu.memory_space<vmem>>, %arg3: memref<4x30xf32, #tpu.memory_space<vmem>>) attributes {dimension_semantics = [#tpu.dimension_semantics<parallel>], iteration_bounds = array<i64: 1>, scalar_prefetch = 1 : i64, scratch_operands = 0 : i64, tpu.core_type = #tpu.core_type<tc>, window_params = [{transform_indices = @transform_0, window_bounds = array<i64: 4, 32>}, {transform_indices = @transform_1, window_bounds = array<i64: 4, 30>}]} {
    %c0 = arith.constant 0 : index
    %c0_0 = arith.constant 0 : index
    %0 = vector.load %arg2[%c0, %c0_0] : memref<4x32xf32, #tpu.memory_space<vmem>>, vector<4x32xf32>
    %c0_1 = arith.constant 0 : index
    %1 = memref.load %arg1[%c0_1] : memref<3xf32, #tpu.memory_space<smem>>
    %2 = vector.extract_strided_slice %0 {offsets = [0, 0], sizes = [4, 30], strides = [1, 1]} : vector<4x32xf32> to vector<4x30xf32>
    %3 = vector.broadcast %1 : f32 to vector<4x30xf32>
    %4 = arith.mulf %3, %2 : vector<4x30xf32>
    %c1 = arith.constant 1 : index
    %5 = memref.load %arg1[%c1] : memref<3xf32, #tpu.memory_space<smem>>
    %6 = vector.extract_strided_slice %0 {offsets = [0, 1], sizes = [4, 30], strides = [1, 1]} : vector<4x32xf32> to vector<4x30xf32>
    %7 = vector.broadcast %5 : f32 to vector<4x30xf32>
    %8 = arith.mulf %7, %6 : vector<4x30xf32>
    %9 = arith.addf %4, %8 : vector<4x30xf32>
    %c2 = arith.constant 2 : index
    %10 = memref.load %arg1[%c2] : memref<3xf32, #tpu.memory_space<smem>>
    %11 = vector.extract_strided_slice %0 {offsets = [0, 2], sizes = [4, 30], strides = [1, 1]} : vector<4x32xf32> to vector<4x30xf32>
    %12 = vector.broadcast %10 : f32 to vector<4x30xf32>
    %13 = arith.mulf %12, %11 : vector<4x30xf32>
    %14 = arith.addf %9, %13 : vector<4x30xf32>
    %c0_2 = arith.constant 0 : index
    %c0_3 = arith.constant 0 : index
    %15 = vector.load %arg3[%c0_2, %c0_3] : memref<4x30xf32, #tpu.memory_space<vmem>>, vector<4x30xf32>
    tpu.vector_store %arg3[%c0_2, %c0_3], %14 {strides = array<i32>} : memref<4x30xf32, #tpu.memory_space<vmem>>, vector<4x30xf32>,
    return
  }
  func.func @transform_0(%arg0: i32, %arg1: memref<3xf32, #tpu.memory_space<smem>>) -> (i32, i32) {
    %c0_i32 = arith.constant 0 : i32
    %c0_i32_0 = arith.constant 0 : i32
    return %arg0, %c0_i32 : i32, i32
  }
  func.func @transform_1(%arg0: i32, %arg1: memref<3xf32, #tpu.memory_space<smem>>) -> (i32, i32) {
    %c0_i32 = arith.constant 0 : i32
    %c0_i32_0 = arith.constant 0 : i32
    return %arg0, %c0_i32 : i32, i32
  }
}

</mosaic_0001>

<llo_original>
// kernel: tpu_custom_call.1
$region0: #{tpu_custom_call.1}
  #allocation0 [shape = 'u32[]', space=smem, size = 0x4, offset = 0x4, fixed_abs, tag = 'smem constant byte address 0x4 - core index']
  #allocation1 [shape = 'u32[144,128]{1,0:T(1,128)}', space=vmem, size = 0x12000, scoped, tag = 'internal scratch']
  #allocation2 [shape = 's32[1]{0}', space=sflag, size = 0x4, scoped, tag = 'scoped memory for tpu_custom_call.1']
  #allocation3 [shape = 'u8[512]{0}', space=smem, size = 0x200, scoped, tag = 'prefetched SMEM operand 0']
  %s0 = inlined_call_operand.hbm [shape: f32[3], index: 0, kind: input, shape index: {}]
  %s1 = inlined_call_operand.hbm [shape: f32[4,32], index: 1, kind: input, shape index: {}]
  %s2 = inlined_call_operand.hbm [shape: f32[4,30], index: 2, kind: output, shape index: {}]
  %s3 = sld [smem:[#allocation0]]
  $region18: #{tpu_custom_call.1} parent=0
    _
  %s5 = ssub.s32 1, %s3
  %s6 = scalar_select 0, %s5, %s3
  %8 = dma.hbm_to_smem %s0, 16, [#allocation3], [#allocation2]
  %9 = dma.done [#allocation2], 16
  %10 = sfence
  $region1: #{tpu_custom_call.1} parent=0
    #allocation4 [shape = 'u8[2048]{0}', space=vmem, size = 0x800, scoped, tag = 'input window, operand 1, single buffered']
    #allocation5 [shape = 's32[1]{0}', space=sflag, size = 0x4, scoped, tag = 'scoped memory for tpu_custom_call.1']
    #allocation6 [shape = 's32[1]{0}', space=sflag, size = 0x4, scoped, tag = 'scoped memory for tpu_custom_call.1']
    #allocation7 [shape = 'u8[2048]{0}', space=vmem, size = 0x800, scoped, tag = 'output window, operand 0, single buffered']
    %11 = vsyncpa [#allocation5], 0
    %12 = vsyncpa [#allocation6], 0
    // Predicated region
    $region2: #{tpu_custom_call.1} parent=1 // pred_check
      _
    $region3: #{tpu_custom_call.1} parent=1 // pred_check_branch
      %14 = sbr.rel (0) target = $region5
    $region4: #{tpu_custom_call.1} parent=1 // pred_region
      %s16 = ssub.s32 64, 64
      %17 = vsyncadd [#allocation5], %s16
      %s19 = sshll.u32 [#allocation4], 4
      %s20 = int_to_ptr.vmem [resolvable:$true] %s19
      %22 = dma.hbm_to_vmem [thread:$0]  %s1, 64, %s20, [#allocation5]
    $region5: #{tpu_custom_call.1} parent=1 // pred_fallthru
      _
    // Predicated region
    $region6: #{tpu_custom_call.1} parent=1 // pred_check
      _
    $region7: #{tpu_custom_call.1} parent=1 // pred_check_branch
      %24 = sbr.rel (0) target = $region9
    $region8: #{tpu_custom_call.1} parent=1 // pred_region
      %25 = dma.done [#allocation5], 64
    $region9: #{tpu_custom_call.1} parent=1 // pred_fallthru
      _
    %v26 = vld [vmem:[#allocation4] sm:$0xf]
    %s27 = sld [smem:[#allocation3]]
    %v28 = vstv %s27
    %v29 = vmul.f32 %v28, %v26
    %s30 = sld [smem:[#allocation3 + $0x1]]
    %v31 = vstv %s30
    %v32 = vmul.f32 %v31, %v26
    %34 = vrot.lane.b32.xlu0 %v32, 127
    %v35 = vpop.permute.xlu0 %34
    %v37 = vadd.f32 %v29, %v35
    %s38 = sld [smem:[#allocation3 + $0x2]]
    %v39 = vstv %s38
    %v40 = vmul.f32 %v39, %v26
    %42 = vrot.lane.b32.xlu0 %v40, 126
    %v43 = vpop.permute.xlu0 %42
    %v45 = vadd.f32 %v37, %v43
    %vm46 = vcmask 240640
    %47 = vst.msk [vmem:[#allocation7] sm:$0xf] %vm46, %v45
    // Predicated region
    $region10: #{tpu_custom_call.1} parent=1 // pred_check
      _
    $region11: #{tpu_custom_call.1} parent=1 // pred_check_branch
      %49 = sbr.rel (0) target = $region13
    $region12: #{tpu_custom_call.1} parent=1 // pred_region
      %s51 = ssub.s32 64, 64
      %52 = vsyncadd [#allocation6], %s51
      %s54 = sshll.u32 [#allocation7], 4
      %s55 = int_to_ptr.vmem [resolvable:$true] %s54
      %57 = dma.vmem_to_hbm [thread:$0]  %s55, 64, %s2, [#allocation6]
    $region13: #{tpu_custom_call.1} parent=1 // pred_fallthru
      _
    // Predicated region
    $region14: #{tpu_custom_call.1} parent=1 // pred_check
      _
    $region15: #{tpu_custom_call.1} parent=1 // pred_check_branch
      %59 = sbr.rel (0) target = $region17
    $region16: #{tpu_custom_call.1} parent=1 // pred_region
      %60 = dma.done [#allocation6], 64
    $region17: #{tpu_custom_call.1} parent=1 // pred_fallthru
      _
    %61 = vsyncpa [#allocation5], 1
    %62 = vsyncpa [#allocation6], 1

</llo_original>
